<compile_context>
chip_gen: v7x
topology: tpu7x:2x2x1
jax: 0.10.0
libtpu: 0.0.40
codegen_flags: <defaults>
</compile_context>

<pallas_src>
from functools import partial
from math import sqrt

import jax
import jax.numpy as jnp
from jax.experimental import pallas as pl
from jax.experimental.pallas import tpu as pltpu


# ----------------------------------------------------------------------------
# Attention + projections kernel: one batch tile per grid step, heads unrolled.
# ----------------------------------------------------------------------------
def reprogram_attn_kernel(tgt_ref, kT_ref, v_ref, wq_ref, bq_ref, wo_ref, bo_ref,
                          out_ref, ctx_ref, *, n_heads, head_dim, scale):
    bt, seq_l, d_model = tgt_ref.shape
    m_rows = bt * seq_l

    # Layout-safe merge of (Bt, L) -> M: wrapper guarantees L % 8 == 0 or Bt == 1.
    tgt = tgt_ref[...].reshape(m_rows, d_model)

    # Hoisted full-width Q projection; 1/sqrt(E) folded into q (d_hid wide, not S wide).
    q_all = jnp.dot(tgt, wq_ref[...], preferred_element_type=jnp.float32)
    q_all = (q_all + bq_ref[...].astype(jnp.float32)) * jnp.float32(scale)
    q_all = q_all.astype(tgt.dtype)                                  # [M, d_hid]

    # Heads: statically unrolled (n_heads is a trace-time constant). Each head writes
    # its E-wide lane slice of the narrow f32 context scratch.
    for h in range(n_heads):
        cols = slice(h * head_dim, (h + 1) * head_dim)
        q_h = q_all[:, cols]                                         # [M, E]

        scores = jnp.dot(q_h, kT_ref[h], preferred_element_type=jnp.float32)   # [M, S]
        m = jnp.max(scores, axis=-1, keepdims=True)
        e = jnp.exp(scores - m)
        denom = jnp.sum(e, axis=-1, keepdims=True)                   # [M, 1]
        # TODO(synk): attention dropout (p=0.1) omitted — forward implemented in eval mode.

        ctx = jnp.dot(e.astype(v_ref.dtype), v_ref[h],
                      preferred_element_type=jnp.float32)            # [M, E] (unnormalized)
        # Normalize at width E (not S); exact divide on the [M,1] denominator is negligible.
        ctx_ref[:, cols] = ctx * (1.0 / denom)

    # Single output projection over the full d_hid contraction + bias.
    out = jnp.dot(ctx_ref[...].astype(tgt.dtype), wo_ref[...],
                  preferred_element_type=jnp.float32)
    out = out + bo_ref[...].astype(jnp.float32)
    out_ref[...] = out.reshape(out_ref.shape).astype(out_ref.dtype)


def _pick_batch_tile(batch, seq_len, max_rows=256, min_grid_steps=2):
    """Largest divisor Bt of `batch` with Bt*L <= max_rows (v7x-safe), preferring
    >= min_grid_steps grid steps (v7x has 2 TensorCores) when tiles stay >= 64 rows."""
    if seq_len % 8 != 0:
        # (1, L, D) -> (L, D) is a pure squeeze, always layout-preserving.
        return 1
    best = 1
    for cand in range(1, batch + 1):
        if batch % cand == 0 and cand * seq_len <= max_rows:
            best = cand
    if batch // best < min_grid_steps:
        for cand in range(best - 1, 0, -1):
            if batch % cand == 0 and batch // cand >= min_grid_steps and cand * seq_len >= 64:
                best = cand
                break
    return best


def _vmem_limit_bytes():
    try:
        kind = jax.devices()[0].device_kind.lower()
    except Exception:
        kind = ""
    if "v5" in kind or "v6" in kind:
        return 100 * 1024 * 1024     # 128 MiB physical on v5e/v6e — use it
    return 48 * 1024 * 1024          # conservative under v7x's 64 MiB physical VMEM


def reprogramming_forward(target, source, value, params, n_heads):
    B, L, d_model = target.shape
    S, d_llm = source.shape
    d_hid = params["wq"].shape[1]                  # H * E
    H = n_heads
    assert d_hid % H == 0, "d_keys * n_heads must be divisible by n_heads"
    E = d_hid // H

    # ---- Batch-invariant K/V projections: once, in plain XLA (tiny [S, d_hid] results),
    # emitted head-split and pre-transposed so the kernel only issues 2-D matmuls. ----
    k_proj = (jnp.dot(source, params["wk"], preferred_element_type=jnp.float32)
              + params["bk"]).astype(source.dtype)                      # [S, d_hid]
    v_proj = (jnp.dot(value, params["wv"], preferred_element_type=jnp.float32)
              + params["bv"]).astype(value.dtype)                       # [S, d_hid]
    k_heads_t = k_proj.reshape(S, H, E).transpose(1, 2, 0)              # [H, E, S]
    v_heads = v_proj.reshape(S, H, E).transpose(1, 0, 2)                # [H, S, E]

    Bt = _pick_batch_tile(B, L)
    num_bt = B // Bt

    kernel = partial(reprogram_attn_kernel, n_heads=H, head_dim=E, scale=1.0 / sqrt(E))

    return pl.pallas_call(
        kernel,
        out_shape=jax.ShapeDtypeStruct((B, L, d_llm), target.dtype),
        grid_spec=pltpu.PrefetchScalarGridSpec(
            num_scalar_prefetch=0,
            grid=(num_bt,),                                              # purely parallel
            in_specs=[
                pl.BlockSpec((Bt, L, d_model), lambda b: (b, 0, 0)),     # target tile
                pl.BlockSpec((H, E, S),        lambda b: (0, 0, 0)),     # K^T (resident)
                pl.BlockSpec((H, S, E),        lambda b: (0, 0, 0)),     # V   (resident)
                pl.BlockSpec((d_model, d_hid), lambda b: (0, 0)),        # Wq  (full)
                pl.BlockSpec((1, d_hid),       lambda b: (0, 0)),        # bq
                pl.BlockSpec((d_hid, d_llm),   lambda b: (0, 0)),        # Wo  (full)
                pl.BlockSpec((1, d_llm),       lambda b: (0, 0)),        # bo
            ],
            out_specs=pl.BlockSpec((Bt, L, d_llm), lambda b: (b, 0, 0)),
            scratch_shapes=[pltpu.VMEM((Bt * L, d_hid), jnp.float32)],   # narrow ctx scratch
        ),
        compiler_params=pltpu.CompilerParams(
            dimension_semantics=("parallel",),
            vmem_limit_bytes=_vmem_limit_bytes(),
        ),
    )(target, k_heads_t, v_heads, params["wq"], params["bq"], params["wo"], params["bo"])


# ----------------------------------------------------------------------------
# Pure-JAX reference mirroring the PyTorch module (eval mode) + init + demo.
# ----------------------------------------------------------------------------
def reference_forward(target, source, value, params, n_heads):
    B, L, _ = target.shape
    S, _ = source.shape
    d_hid = params["wq"].shape[1]
    E = d_hid // n_heads
    q = (target @ params["wq"] + params["bq"]).reshape(B, L, n_heads, E)
    k = (source @ params["wk"] + params["bk"]).reshape(S, n_heads, E)
    v = (value @ params["wv"] + params["bv"]).reshape(S, n_heads, E)
    scores = jnp.einsum("blhe,she->bhls", q, k)
    A = jax.nn.softmax(scores / jnp.sqrt(jnp.float32(E)), axis=-1)
    o = jnp.einsum("bhls,she->blhe", A, v).reshape(B, L, d_hid)
    return o @ params["wo"] + params["bo"]


def init_params(key, d_model, n_heads, d_llm, d_keys=None, dtype=jnp.float32):
    d_keys = d_keys or d_model // n_heads
    d_hid = d_keys * n_heads
    ks = jax.random.split(key, 8)

    def linear(wkey, bkey, fan_in, fan_out):
        # PyTorch nn.Linear default init: U(-1/sqrt(fan_in), 1/sqrt(fan_in))
        bound = 1.0 / sqrt(fan_in)
        w = jax.random.uniform(wkey, (fan_in, fan_out), dtype, -bound, bound)
        b = jax.random.uniform(bkey, (1, fan_out), dtype, -bound, bound)
        return w, b

    wq, bq = linear(ks[0], ks[1], d_model, d_hid)
    wk, bk = linear(ks[2], ks[3], d_llm, d_hid)
    wv, bv = linear(ks[4], ks[5], d_llm, d_hid)
    wo, bo = linear(ks[6], ks[7], d_hid, d_llm)
    return dict(wq=wq, bq=bq, wk=wk, bk=bk, wv=wv, bv=bv, wo=wo, bo=bo)


if __name__ == "__main__":
    B, L, S = 2, 8, 16
    d_model, n_heads, d_llm = 32, 4, 64   # d_keys = 8, H*E = 32

    key = jax.random.PRNGKey(0)
    k_tgt, k_src, k_val, k_par = jax.random.split(key, 4)

    target = jax.random.normal(k_tgt, (B, L, d_model), jnp.float32)
    source = jax.random.normal(k_src, (S, d_llm), jnp.float32)
    value = jax.random.normal(k_val, (S, d_llm), jnp.float32)
    params = init_params(k_par, d_model, n_heads, d_llm)

    out = reprogramming_forward(target, source, value, params, n_heads)
    out = jax.block_until_ready(out)

    ref = reference_forward(target, source, value, params, n_heads)
    assert out.shape == (B, L, d_llm), out.shape
    assert jnp.allclose(out, ref, atol=2e-3, rtol=2e-3), float(jnp.max(jnp.abs(out - ref)))

    print("KERNEL_OK")
</pallas_src>

<mosaic_0001>
module attributes {stable_mosaic.version = 11 : i64} {
  func.func @reprogram_attn_kernel(%arg0: i32, %arg1: memref<2x8x32xf32, #tpu.memory_space<vmem>>, %arg2: memref<4x8x16xf32, #tpu.memory_space<vmem>>, %arg3: memref<4x16x8xf32, #tpu.memory_space<vmem>>, %arg4: memref<32x32xf32, #tpu.memory_space<vmem>>, %arg5: memref<1x32xf32, #tpu.memory_space<vmem>>, %arg6: memref<32x64xf32, #tpu.memory_space<vmem>>, %arg7: memref<1x64xf32, #tpu.memory_space<vmem>>, %arg8: memref<2x8x64xf32, #tpu.memory_space<vmem>>, %arg9: memref<16x32xf32, #tpu.memory_space<vmem>>) attributes {dimension_semantics = [#tpu.dimension_semantics<parallel>], iteration_bounds = array<i64: 1>, scalar_prefetch = 0 : i64, scratch_operands = 1 : i64, tpu.core_type = #tpu.core_type<tc>, window_params = [{transform_indices = @transform_0, window_bounds = array<i64: 2, 8, 32>}, {pipeline_mode = #tpu.pipeline_mode<synchronous>, transform_indices = @transform_1, window_bounds = array<i64: 4, 8, 16>}, {pipeline_mode = #tpu.pipeline_mode<synchronous>, transform_indices = @transform_2, window_bounds = array<i64: 4, 16, 8>}, {pipeline_mode = #tpu.pipeline_mode<synchronous>, transform_indices = @transform_3, window_bounds = array<i64: 32, 32>}, {pipeline_mode = #tpu.pipeline_mode<synchronous>, transform_indices = @transform_4, window_bounds = array<i64: 1, 32>}, {pipeline_mode = #tpu.pipeline_mode<synchronous>, transform_indices = @transform_5, window_bounds = array<i64: 32, 64>}, {pipeline_mode = #tpu.pipeline_mode<synchronous>, transform_indices = @transform_6, window_bounds = array<i64: 1, 64>}, {transform_indices = @transform_7, window_bounds = array<i64: 2, 8, 64>}]} {
    %c0 = arith.constant 0 : index
    %c0_0 = arith.constant 0 : index
    %c0_1 = arith.constant 0 : index
    %0 = vector.load %arg1[%c0, %c0_0, %c0_1] : memref<2x8x32xf32, #tpu.memory_space<vmem>>, vector<2x8x32xf32>
    %1 = vector.shape_cast %0 : vector<2x8x32xf32> to vector<16x32xf32>
    %c0_2 = arith.constant 0 : index
    %c0_3 = arith.constant 0 : index
    %2 = vector.load %arg4[%c0_2, %c0_3] : memref<32x32xf32, #tpu.memory_space<vmem>>, vector<32x32xf32>
    %cst = arith.constant dense<0.000000e+00> : vector<16x32xf32>
    %3 = tpu.matmul %1, %2, %cst {dimension_numbers = #tpu.dot_dimension_numbers<[1], [0], [0], [1], [0, 0, 1, 1], [], []>} : vector<16x32xf32>, vector<32x32xf32>, vector<16x32xf32> -> vector<16x32xf32>
    %c0_4 = arith.constant 0 : index
    %c0_5 = arith.constant 0 : index
    %4 = vector.load %arg5[%c0_4, %c0_5] : memref<1x32xf32, #tpu.memory_space<vmem>>, vector<1x32xf32>
    %5 = vector.broadcast %4 : vector<1x32xf32> to vector<16x32xf32>
    %6 = arith.addf %3, %5 : vector<16x32xf32>
    %cst_6 = arith.constant 0.353553385 : f32
    %7 = vector.broadcast %cst_6 : f32 to vector<16x32xf32>
    %8 = arith.mulf %6, %7 : vector<16x32xf32>
    %9 = vector.extract_strided_slice %8 {offsets = [0, 0], sizes = [16, 8], strides = [1, 1]} : vector<16x32xf32> to vector<16x8xf32>
    %c0_7 = arith.constant 0 : index
    %c0_8 = arith.constant 0 : index
    %c0_9 = arith.constant 0 : index
    %10 = vector.load %arg2[%c0_7, %c0_8, %c0_9] : memref<4x8x16xf32, #tpu.memory_space<vmem>>, vector<1x8x16xf32>
    %11 = vector.shape_cast %10 : vector<1x8x16xf32> to vector<8x16xf32>
    %cst_10 = arith.constant dense<0.000000e+00> : vector<16x16xf32>
    %12 = tpu.matmul %9, %11, %cst_10 {dimension_numbers = #tpu.dot_dimension_numbers<[1], [0], [0], [1], [0, 0, 1, 1], [], []>} : vector<16x8xf32>, vector<8x16xf32>, vector<16x16xf32> -> vector<16x16xf32>
    %cst_11 = arith.constant dense<0xFF800000> : vector<16xf32>
    %13 = vector.multi_reduction <maximumf>, %12, %cst_11 [1] : vector<16x16xf32> to vector<16xf32>
    %14 = vector.shape_cast %13 : vector<16xf32> to vector<16x1xf32>
    %15 = vector.broadcast %14 : vector<16x1xf32> to vector<16x16xf32>
    %16 = arith.subf %12, %15 : vector<16x16xf32>
    %17 = math.exp %16 : vector<16x16xf32>
    %cst_12 = arith.constant dense<0.000000e+00> : vector<16xf32>
    %18 = vector.multi_reduction <add>, %17, %cst_12 [1] : vector<16x16xf32> to vector<16xf32>
    %19 = vector.shape_cast %18 : vector<16xf32> to vector<16x1xf32>
    %c0_13 = arith.constant 0 : index
    %c0_14 = arith.constant 0 : index
    %c0_15 = arith.constant 0 : index
    %20 = vector.load %arg3[%c0_13, %c0_14, %c0_15] : memref<4x16x8xf32, #tpu.memory_space<vmem>>, vector<1x16x8xf32>
    %21 = vector.shape_cast %20 : vector<1x16x8xf32> to vector<16x8xf32>
    %cst_16 = arith.constant dense<0.000000e+00> : vector<16x8xf32>
    %22 = tpu.matmul %17, %21, %cst_16 {dimension_numbers = #tpu.dot_dimension_numbers<[1], [0], [0], [1], [0, 0, 1, 1], [], []>} : vector<16x16xf32>, vector<16x8xf32>, vector<16x8xf32> -> vector<16x8xf32>
    %cst_17 = arith.constant 1.000000e+00 : f32
    %23 = vector.broadcast %cst_17 : f32 to vector<16x1xf32>
    %24 = arith.divf %23, %19 : vector<16x1xf32>
    %25 = vector.broadcast %24 : vector<16x1xf32> to vector<16x8xf32>
    %26 = arith.mulf %22, %25 : vector<16x8xf32>
    %c0_18 = arith.constant 0 : index
    %c0_19 = arith.constant 0 : index
    %27 = vector.load %arg9[%c0_18, %c0_19] : memref<16x32xf32, #tpu.memory_space<vmem>>, vector<16x8xf32>
    tpu.vector_store %arg9[%c0_18, %c0_19], %26 {strides = array<i32>} : memref<16x32xf32, #tpu.memory_space<vmem>>, vector<16x8xf32>,
    %28 = vector.extract_strided_slice %8 {offsets = [0, 8], sizes = [16, 8], strides = [1, 1]} : vector<16x32xf32> to vector<16x8xf32>
    %c1 = arith.constant 1 : index
    %c0_20 = arith.constant 0 : index
    %c0_21 = arith.constant 0 : index
    %29 = vector.load %arg2[%c1, %c0_20, %c0_21] : memref<4x8x16xf32, #tpu.memory_space<vmem>>, vector<1x8x16xf32>
    %30 = vector.shape_cast %29 : vector<1x8x16xf32> to vector<8x16xf32>
    %cst_22 = arith.constant dense<0.000000e+00> : vector<16x16xf32>
    %31 = tpu.matmul %28, %30, %cst_22 {dimension_numbers = #tpu.dot_dimension_numbers<[1], [0], [0], [1], [0, 0, 1, 1], [], []>} : vector<16x8xf32>, vector<8x16xf32>, vector<16x16xf32> -> vector<16x16xf32>
    %cst_23 = arith.constant dense<0xFF800000> : vector<16xf32>
    %32 = vector.multi_reduction <maximumf>, %31, %cst_23 [1] : vector<16x16xf32> to vector<16xf32>
    %33 = vector.shape_cast %32 : vector<16xf32> to vector<16x1xf32>
    %34 = vector.broadcast %33 : vector<16x1xf32> to vector<16x16xf32>
    %35 = arith.subf %31, %34 : vector<16x16xf32>
    %36 = math.exp %35 : vector<16x16xf32>
    %cst_24 = arith.constant dense<0.000000e+00> : vector<16xf32>
    %37 = vector.multi_reduction <add>, %36, %cst_24 [1] : vector<16x16xf32> to vector<16xf32>
    %38 = vector.shape_cast %37 : vector<16xf32> to vector<16x1xf32>
    %c1_25 = arith.constant 1 : index
    %c0_26 = arith.constant 0 : index
    %c0_27 = arith.constant 0 : index
    %39 = vector.load %arg3[%c1_25, %c0_26, %c0_27] : memref<4x16x8xf32, #tpu.memory_space<vmem>>, vector<1x16x8xf32>
    %40 = vector.shape_cast %39 : vector<1x16x8xf32> to vector<16x8xf32>
    %cst_28 = arith.constant dense<0.000000e+00> : vector<16x8xf32>
    %41 = tpu.matmul %36, %40, %cst_28 {dimension_numbers = #tpu.dot_dimension_numbers<[1], [0], [0], [1], [0, 0, 1, 1], [], []>} : vector<16x16xf32>, vector<16x8xf32>, vector<16x8xf32> -> vector<16x8xf32>
    %cst_29 = arith.constant 1.000000e+00 : f32
    %42 = vector.broadcast %cst_29 : f32 to vector<16x1xf32>
    %43 = arith.divf %42, %38 : vector<16x1xf32>
    %44 = vector.broadcast %43 : vector<16x1xf32> to vector<16x8xf32>
    %45 = arith.mulf %41, %44 : vector<16x8xf32>
    %c0_30 = arith.constant 0 : index
    %c8 = arith.constant 8 : index
    %46 = vector.load %arg9[%c0_30, %c8] : memref<16x32xf32, #tpu.memory_space<vmem>>, vector<16x8xf32>
    tpu.vector_store %arg9[%c0_30, %c8], %45 {strides = array<i32>} : memref<16x32xf32, #tpu.memory_space<vmem>>, vector<16x8xf32>,
    %47 = vector.extract_strided_slice %8 {offsets = [0, 16], sizes = [16, 8], strides = [1, 1]} : vector<16x32xf32> to vector<16x8xf32>
    %c2 = arith.constant 2 : index
    %c0_31 = arith.constant 0 : index
    %c0_32 = arith.constant 0 : index
    %48 = vector.load %arg2[%c2, %c0_31, %c0_32] : memref<4x8x16xf32, #tpu.memory_space<vmem>>, vector<1x8x16xf32>
    %49 = vector.shape_cast %48 : vector<1x8x16xf32> to vector<8x16xf32>
    %cst_33 = arith.constant dense<0.000000e+00> : vector<16x16xf32>
    %50 = tpu.matmul %47, %49, %cst_33 {dimension_numbers = #tpu.dot_dimension_numbers<[1], [0], [0], [1], [0, 0, 1, 1], [], []>} : vector<16x8xf32>, vector<8x16xf32>, vector<16x16xf32> -> vector<16x16xf32>
    %cst_34 = arith.constant dense<0xFF800000> : vector<16xf32>
    %51 = vector.multi_reduction <maximumf>, %50, %cst_34 [1] : vector<16x16xf32> to vector<16xf32>
    %52 = vector.shape_cast %51 : vector<16xf32> to vector<16x1xf32>
    %53 = vector.broadcast %52 : vector<16x1xf32> to vector<16x16xf32>
    %54 = arith.subf %50, %53 : vector<16x16xf32>
    %55 = math.exp %54 : vector<16x16xf32>
    %cst_35 = arith.constant dense<0.000000e+00> : vector<16xf32>
    %56 = vector.multi_reduction <add>, %55, %cst_35 [1] : vector<16x16xf32> to vector<16xf32>
    %57 = vector.shape_cast %56 : vector<16xf32> to vector<16x1xf32>
    %c2_36 = arith.constant 2 : index
    %c0_37 = arith.constant 0 : index
    %c0_38 = arith.constant 0 : index
    %58 = vector.load %arg3[%c2_36, %c0_37, %c0_38] : memref<4x16x8xf32, #tpu.memory_space<vmem>>, vector<1x16x8xf32>
    %59 = vector.shape_cast %58 : vector<1x16x8xf32> to vector<16x8xf32>
    %cst_39 = arith.constant dense<0.000000e+00> : vector<16x8xf32>
    %60 = tpu.matmul %55, %59, %cst_39 {dimension_numbers = #tpu.dot_dimension_numbers<[1], [0], [0], [1], [0, 0, 1, 1], [], []>} : vector<16x16xf32>, vector<16x8xf32>, vector<16x8xf32> -> vector<16x8xf32>
    %cst_40 = arith.constant 1.000000e+00 : f32
    %61 = vector.broadcast %cst_40 : f32 to vector<16x1xf32>
    %62 = arith.divf %61, %57 : vector<16x1xf32>
    %63 = vector.broadcast %62 : vector<16x1xf32> to vector<16x8xf32>
    %64 = arith.mulf %60, %63 : vector<16x8xf32>
    %c0_41 = arith.constant 0 : index
    %c16 = arith.constant 16 : index
    %65 = vector.load %arg9[%c0_41, %c16] : memref<16x32xf32, #tpu.memory_space<vmem>>, vector<16x8xf32>
    tpu.vector_store %arg9[%c0_41, %c16], %64 {strides = array<i32>} : memref<16x32xf32, #tpu.memory_space<vmem>>, vector<16x8xf32>,
    %66 = vector.extract_strided_slice %8 {offsets = [0, 24], sizes = [16, 8], strides = [1, 1]} : vector<16x32xf32> to vector<16x8xf32>
    %c3 = arith.constant 3 : index
    %c0_42 = arith.constant 0 : index
    %c0_43 = arith.constant 0 : index
    %67 = vector.load %arg2[%c3, %c0_42, %c0_43] : memref<4x8x16xf32, #tpu.memory_space<vmem>>, vector<1x8x16xf32>
    %68 = vector.shape_cast %67 : vector<1x8x16xf32> to vector<8x16xf32>
    %cst_44 = arith.constant dense<0.000000e+00> : vector<16x16xf32>
    %69 = tpu.matmul %66, %68, %cst_44 {dimension_numbers = #tpu.dot_dimension_numbers<[1], [0], [0], [1], [0, 0, 1, 1], [], []>} : vector<16x8xf32>, vector<8x16xf32>, vector<16x16xf32> -> vector<16x16xf32>
    %cst_45 = arith.constant dense<0xFF800000> : vector<16xf32>
    %70 = vector.multi_reduction <maximumf>, %69, %cst_45 [1] : vector<16x16xf32> to vector<16xf32>
    %71 = vector.shape_cast %70 : vector<16xf32> to vector<16x1xf32>
    %72 = vector.broadcast %71 : vector<16x1xf32> to vector<16x16xf32>
    %73 = arith.subf %69, %72 : vector<16x16xf32>
    %74 = math.exp %73 : vector<16x16xf32>
    %cst_46 = arith.constant dense<0.000000e+00> : vector<16xf32>
    %75 = vector.multi_reduction <add>, %74, %cst_46 [1] : vector<16x16xf32> to vector<16xf32>
    %76 = vector.shape_cast %75 : vector<16xf32> to vector<16x1xf32>
    %c3_47 = arith.constant 3 : index
    %c0_48 = arith.constant 0 : index
    %c0_49 = arith.constant 0 : index
    %77 = vector.load %arg3[%c3_47, %c0_48, %c0_49] : memref<4x16x8xf32, #tpu.memory_space<vmem>>, vector<1x16x8xf32>
    %78 = vector.shape_cast %77 : vector<1x16x8xf32> to vector<16x8xf32>
    %cst_50 = arith.constant dense<0.000000e+00> : vector<16x8xf32>
    %79 = tpu.matmul %74, %78, %cst_50 {dimension_numbers = #tpu.dot_dimension_numbers<[1], [0], [0], [1], [0, 0, 1, 1], [], []>} : vector<16x16xf32>, vector<16x8xf32>, vector<16x8xf32> -> vector<16x8xf32>
    %cst_51 = arith.constant 1.000000e+00 : f32
    %80 = vector.broadcast %cst_51 : f32 to vector<16x1xf32>
    %81 = arith.divf %80, %76 : vector<16x1xf32>
    %82 = vector.broadcast %81 : vector<16x1xf32> to vector<16x8xf32>
    %83 = arith.mulf %79, %82 : vector<16x8xf32>
    %c0_52 = arith.constant 0 : index
    %c24 = arith.constant 24 : index
    %84 = vector.load %arg9[%c0_52, %c24] : memref<16x32xf32, #tpu.memory_space<vmem>>, vector<16x8xf32>
    tpu.vector_store %arg9[%c0_52, %c24], %83 {strides = array<i32>} : memref<16x32xf32, #tpu.memory_space<vmem>>, vector<16x8xf32>,
    %c0_53 = arith.constant 0 : index
    %c0_54 = arith.constant 0 : index
    %85 = vector.load %arg9[%c0_53, %c0_54] : memref<16x32xf32, #tpu.memory_space<vmem>>, vector<16x32xf32>
    %c0_55 = arith.constant 0 : index
    %c0_56 = arith.constant 0 : index
    %86 = vector.load %arg6[%c0_55, %c0_56] : memref<32x64xf32, #tpu.memory_space<vmem>>, vector<32x64xf32>
    %cst_57 = arith.constant dense<0.000000e+00> : vector<16x64xf32>
    %87 = tpu.matmul %85, %86, %cst_57 {dimension_numbers = #tpu.dot_dimension_numbers<[1], [0], [0], [1], [0, 0, 1, 1], [], []>} : vector<16x32xf32>, vector<32x64xf32>, vector<16x64xf32> -> vector<16x64xf32>
    %c0_58 = arith.constant 0 : index
    %c0_59 = arith.constant 0 : index
    %88 = vector.load %arg7[%c0_58, %c0_59] : memref<1x64xf32, #tpu.memory_space<vmem>>, vector<1x64xf32>
    %89 = vector.broadcast %88 : vector<1x64xf32> to vector<16x64xf32>
    %90 = arith.addf %87, %89 : vector<16x64xf32>
    %91 = vector.shape_cast %90 : vector<16x64xf32> to vector<2x8x64xf32>
    %c0_60 = arith.constant 0 : index
    %c0_61 = arith.constant 0 : index
    %c0_62 = arith.constant 0 : index
    %92 = vector.load %arg8[%c0_60, %c0_61, %c0_62] : memref<2x8x64xf32, #tpu.memory_space<vmem>>, vector<2x8x64xf32>
    tpu.vector_store %arg8[%c0_60, %c0_61, %c0_62], %91 {strides = array<i32>} : memref<2x8x64xf32, #tpu.memory_space<vmem>>, vector<2x8x64xf32>,
    return
  }
  func.func @transform_0(%arg0: i32) -> (i32, i32, i32) {
    %c0_i32 = arith.constant 0 : i32
    %c0_i32_0 = arith.constant 0 : i32
    %c0_i32_1 = arith.constant 0 : i32
    return %arg0, %c0_i32, %c0_i32_0 : i32, i32, i32
  }
  func.func @transform_1(%arg0: i32) -> (i32, i32, i32) {
    %c0_i32 = arith.constant 0 : i32
    %c0_i32_0 = arith.constant 0 : i32
    %c0_i32_1 = arith.constant 0 : i32
    %c0_i32_2 = arith.constant 0 : i32
    return %c0_i32, %c0_i32_0, %c0_i32_1 : i32, i32, i32
  }
  func.func @transform_2(%arg0: i32) -> (i32, i32, i32) {
    %c0_i32 = arith.constant 0 : i32
    %c0_i32_0 = arith.constant 0 : i32
    %c0_i32_1 = arith.constant 0 : i32
    %c0_i32_2 = arith.constant 0 : i32
    return %c0_i32, %c0_i32_0, %c0_i32_1 : i32, i32, i32
  }
  func.func @transform_3(%arg0: i32) -> (i32, i32) {
    %c0_i32 = arith.constant 0 : i32
    %c0_i32_0 = arith.constant 0 : i32
    %c0_i32_1 = arith.constant 0 : i32
    return %c0_i32, %c0_i32_0 : i32, i32
  }
  func.func @transform_4(%arg0: i32) -> (i32, i32) {
    %c0_i32 = arith.constant 0 : i32
    %c0_i32_0 = arith.constant 0 : i32
    %c0_i32_1 = arith.constant 0 : i32
    return %c0_i32, %c0_i32_0 : i32, i32
  }
  func.func @transform_5(%arg0: i32) -> (i32, i32) {
    %c0_i32 = arith.constant 0 : i32
    %c0_i32_0 = arith.constant 0 : i32
    %c0_i32_1 = arith.constant 0 : i32
    return %c0_i32, %c0_i32_0 : i32, i32
  }
  func.func @transform_6(%arg0: i32) -> (i32, i32) {
    %c0_i32 = arith.constant 0 : i32
    %c0_i32_0 = arith.constant 0 : i32
    %c0_i32_1 = arith.constant 0 : i32
    return %c0_i32, %c0_i32_0 : i32, i32
  }
  func.func @transform_7(%arg0: i32) -> (i32, i32, i32) {
    %c0_i32 = arith.constant 0 : i32
    %c0_i32_0 = arith.constant 0 : i32
    %c0_i32_1 = arith.constant 0 : i32
    return %arg0, %c0_i32, %c0_i32_0 : i32, i32, i32
  }
}

</mosaic_0001>

<llo_original>
// kernel: tpu_custom_call.1
$region0: #{tpu_custom_call.1}
  #allocation0 [shape = 'u32[]', space=smem, size = 0x4, offset = 0x4, fixed_abs, tag = 'smem constant byte address 0x4 - core index']
  #allocation1 [shape = 'u32[144,128]{1,0:T(1,128)}', space=vmem, size = 0x12000, scoped, tag = 'internal scratch']
  #allocation2 [shape = 'f32[16,32]{1,0:T(8,128)}', space=vmem, size = 0x2000, scoped, tag = 'scratch operand']
  %s0 = inlined_call_operand.hbm [shape: f32[2,8,32], index: 0, kind: input, shape index: {}]
  %s1 = inlined_call_operand.vmem [shape: f32[4,8,16], index: 1, kind: input, shape index: {}]
  %s2 = inlined_call_operand.vmem [shape: f32[4,16,8], index: 2, kind: input, shape index: {}]
  %s3 = inlined_call_operand.vmem [shape: f32[32,32], index: 3, kind: input, shape index: {}]
  %s4 = inlined_call_operand.vmem [shape: f32[1,32], index: 4, kind: input, shape index: {}]
  %s5 = inlined_call_operand.vmem [shape: f32[32,64], index: 5, kind: input, shape index: {}]
  %s6 = inlined_call_operand.vmem [shape: f32[1,64], index: 6, kind: input, shape index: {}]
  %s7 = inlined_call_operand.hbm [shape: f32[2,8,64], index: 7, kind: output, shape index: {}]
  %s8 = sld [smem:[#allocation0]]
  $region42: #{tpu_custom_call.1} parent=0
    _
  %s10 = ssub.s32 1, %s8
  %s11 = scalar_select 0, %s10, %s8
  $region1: #{tpu_custom_call.1} parent=0
    #allocation3 [shape = 'u8[8192]{0}', space=vmem, size = 0x2000, scoped, tag = 'input window, operand 0, single buffered']
    #allocation4 [shape = 's32[1]{0}', space=sflag, size = 0x4, scoped, tag = 'scoped memory for tpu_custom_call.1']
    #allocation5 [shape = 's32[1]{0}', space=sflag, size = 0x4, scoped, tag = 'scoped memory for tpu_custom_call.1']
    #allocation6 [shape = 'u8[8192]{0}', space=vmem, size = 0x2000, scoped, tag = 'output window, operand 0, single buffered']
    %12 = vsyncpa [#allocation4], 0
    %13 = vsyncpa [#allocation5], 0
    // Predicated region
    $region2: #{tpu_custom_call.1} parent=1 // pred_check
      _
    $region3: #{tpu_custom_call.1} parent=1 // pred_check_branch
      %15 = sbr.rel (0) target = $region5
    $region4: #{tpu_custom_call.1} parent=1 // pred_region
      %s17 = ssub.s32 256, 256
      %18 = vsyncadd [#allocation4], %s17
      %s19 = sshll.u32 [#allocation3], 4
      %s20 = int_to_ptr.vmem [resolvable:$true] %s19
      %25 = dma.hbm_to_vmem [thread:$0]  %s0, 256, %s20, [#allocation4], 128, 128, 8
    $region5: #{tpu_custom_call.1} parent=1 // pred_fallthru
      _
    // Predicated region
    $region6: #{tpu_custom_call.1} parent=1 // pred_check
      _
    $region7: #{tpu_custom_call.1} parent=1 // pred_check_branch
      %27 = sbr.rel (0) target = $region9
    $region8: #{tpu_custom_call.1} parent=1 // pred_region
      _
    $region9: #{tpu_custom_call.1} parent=1 // pred_fallthru
      _
    // Predicated region
    $region10: #{tpu_custom_call.1} parent=1 // pred_check
      _
    $region11: #{tpu_custom_call.1} parent=1 // pred_check_branch
      %29 = sbr.rel (0) target = $region13
    $region12: #{tpu_custom_call.1} parent=1 // pred_region
      _
    $region13: #{tpu_custom_call.1} parent=1 // pred_fallthru
      _
    // Predicated region
    $region14: #{tpu_custom_call.1} parent=1 // pred_check
      _
    $region15: #{tpu_custom_call.1} parent=1 // pred_check_branch
      %31 = sbr.rel (0) target = $region17
    $region16: #{tpu_custom_call.1} parent=1 // pred_region
      _
    $region17: #{tpu_custom_call.1} parent=1 // pred_fallthru
      _
    // Predicated region
    $region18: #{tpu_custom_call.1} parent=1 // pred_check
      _
    $region19: #{tpu_custom_call.1} parent=1 // pred_check_branch
      %33 = sbr.rel (0) target = $region21
    $region20: #{tpu_custom_call.1} parent=1 // pred_region
      _
    $region21: #{tpu_custom_call.1} parent=1 // pred_fallthru
      _
    // Predicated region
    $region22: #{tpu_custom_call.1} parent=1 // pred_check
      _
    $region23: #{tpu_custom_call.1} parent=1 // pred_check_branch
      %35 = sbr.rel (0) target = $region25
    $region24: #{tpu_custom_call.1} parent=1 // pred_region
      _
    $region25: #{tpu_custom_call.1} parent=1 // pred_fallthru
      _
    // Predicated region
    $region26: #{tpu_custom_call.1} parent=1 // pred_check
      _
    $region27: #{tpu_custom_call.1} parent=1 // pred_check_branch
      %37 = sbr.rel (0) target = $region29
    $region28: #{tpu_custom_call.1} parent=1 // pred_region
      _
    $region29: #{tpu_custom_call.1} parent=1 // pred_fallthru
      _
    // Predicated region
    $region30: #{tpu_custom_call.1} parent=1 // pred_check
      _
    $region31: #{tpu_custom_call.1} parent=1 // pred_check_branch
      %39 = sbr.rel (0) target = $region33
    $region32: #{tpu_custom_call.1} parent=1 // pred_region
      %40 = dma.done [#allocation4], 256
    $region33: #{tpu_custom_call.1} parent=1 // pred_fallthru
      _
    %v41 = vld [vmem:[#allocation3] sm:$0xff]
    %v42 = vld [vmem:[#allocation3 + $0x8] sm:$0xff]
    %v43 = vld [vmem:[%s3] sm:$0xff]
    %v44 = vld [vmem:[%s3 + $0x8] sm:$0xff]
    %v45 = vld [vmem:[%s3 + $0x10] sm:$0xff]
    %v46 = vld [vmem:[%s3 + $0x18] sm:$0xff]
    %v47 = vld [vmem:[%s4] sm:$0x1]
    %v49 = vlaneseq
    %v50 = vshrl.u32 %v49, 7
    %v51 = vsub.s32 0, %v50
    %v52 = vrot.slane %v47, %v51
    %vm54 = vcmask 261120
    %v56 = vsel %vm54, %v41, 0
    %v59 = vsel %vm54, %v42, 0
    %61 = vmatprep.subr.mxu0 0.0
    %62 = vmatpush1.msra.mxu0 %v43
    %63 = vmatprep.subr.mxu0 0.0
    %64 = vmatpush1.msra.mxu0 %v44
    %65 = vmatprep.subr.mxu0 0.0
    %66 = vmatpush1.msra.mxu0 %v45
    %67 = vmatprep.subr.mxu0 0.0
    %68 = vmatpush1.msra.mxu0 %v46
    %69 = vmatprep.subr.mxu0 0.0
    %70 = vmatpush1.msra.mxu0 0.0
    %71 = vmatprep.subr.mxu0 0.0
    %72 = vmatpush1.msra.mxu0 0.0
    %73 = vmatprep.subr.mxu0 0.0
    %74 = vmatpush1.msra.mxu0 0.0
    %75 = vmatprep.subr.mxu0 0.0
    %76 = vmatpush1.msra.mxu0 0.0
    %77 = vmatprep.subr.mxu0 0.0
    %78 = vmatpush1.msra.mxu0 0.0
    %79 = vmatprep.subr.mxu0 0.0
    %80 = vmatpush1.msra.mxu0 0.0
    %81 = vmatprep.subr.mxu0 0.0
    %82 = vmatpush1.msra.mxu0 0.0
    %83 = vmatprep.subr.mxu0 0.0
    %84 = vmatpush1.msra.mxu0 0.0
    %85 = vmatprep.subr.mxu0 0.0
    %86 = vmatpush1.msra.mxu0 0.0
    %87 = vmatprep.subr.mxu0 0.0
    %88 = vmatpush1.msra.mxu0 0.0
    %89 = vmatprep.subr.mxu0 0.0
    %90 = vmatpush1.msra.mxu0 0.0
    %91 = vmatprep.subr.mxu0 0.0
    %92 = vmatpush1.msra.mxu0 0.0
    %93 = vmatprep.subr.mxu0 0.0
    %94 = vmatpush1.msra.mxu0 0.0
    %95 = vmatprep.subr.mxu0 0.0
    %96 = vmatpush1.msra.mxu0 0.0
    %97 = vmatprep.subr.mxu0 0.0
    %98 = vmatpush1.msra.mxu0 0.0
    %99 = vmatprep.subr.mxu0 0.0
    %100 = vmatpush1.msra.mxu0 0.0
    %101 = vmatprep.subr.mxu0 0.0
    %102 = vmatpush1.msra.mxu0 0.0
    %103 = vmatprep.subr.mxu0 0.0
    %104 = vmatpush1.msra.mxu0 0.0
    %105 = vmatprep.subr.mxu0 0.0
    %106 = vmatpush1.msra.mxu0 0.0
    %107 = vmatprep.subr.mxu0 0.0
    %108 = vmatpush1.msra.mxu0 0.0
    %109 = vmatprep.subr.mxu0 0.0
    %110 = vmatpush1.msra.mxu0 0.0
    %111 = vmatprep.subr.mxu0 0.0
    %112 = vmatpush1.msra.mxu0 0.0
    %113 = vmatprep.subr.mxu0 0.0
    %114 = vmatpush1.msra.mxu0 0.0
    %115 = vmatprep.subr.mxu0 0.0
    %116 = vmatpush1.msra.mxu0 0.0
    %117 = vmatprep.subr.mxu0 0.0
    %118 = vmatpush1.msra.mxu0 0.0
    %119 = vmatprep.subr.mxu0 0.0
    %120 = vmatpush1.msra.mxu0 0.0
    %121 = vmatprep.subr.mxu0 0.0
    %122 = vmatpush1.msra.mxu0 0.0
    %123 = vmatprep.subr.mxu0 0.0
    %124 = vmatpush1.msra.mxu0 0.0
    %125 = vmatprep.mubr.f32.mxu0 0.0
    %126 = vmatmul.mubr.f32.gmra.mrb[0].mxu0 %v56
    %v127 = vpop.f32.mrb[0].mxu0
    %v128 = vadd.f32 %v52, %v127
    %v129 = vpop.f32.mrb[0].mxu0
    %130 = vmatprep.mubr.f32.mxu0 0.0
    %131 = vmatmul.mubr.f32.gmra.mrb[0].mxu0 %v59
    %v132 = vpop.f32.mrb[0].mxu0
    %v133 = vadd.f32 %v52, %v132
    %v134 = vpop.f32.mrb[0].mxu0
    %135 = vdwg.mxu0
    %v136 = vmul.f32 %v128, 0.35355338
    %v137 = vmul.f32 %v133, 0.35355338
    %v138 = vld [vmem:[%s1] sm:$0xff]
    %vm139 = vcmask 64512
    %v141 = vsel %vm139, %v136, 0
    %v144 = vsel %vm139, %v137, 0
    %146 = vmatprep.subr.mxu0 0.0
    %147 = vmatpush1.msra.mxu0 %v138
    %148 = vmatprep.subr.mxu0 0.0
    %149 = vmatpush1.msra.mxu0 0.0
    %150 = vmatprep.subr.mxu0 0.0
    %151 = vmatpush1.msra.mxu0 0.0
    %152 = vmatprep.subr.mxu0 0.0
    %153 = vmatpush1.msra.mxu0 0.0
    %154 = vmatprep.subr.mxu0 0.0
    %155 = vmatpush1.msra.mxu0 0.0
    %156 = vmatprep.subr.mxu0 0.0
    %157 = vmatpush1.msra.mxu0 0.0
    %158 = vmatprep.subr.mxu0 0.0
    %159 = vmatpush1.msra.mxu0 0.0
    %160 = vmatprep.subr.mxu0 0.0
    %161 = vmatpush1.msra.mxu0 0.0
    %162 = vmatprep.subr.mxu0 0.0
    %163 = vmatpush1.msra.mxu0 0.0
    %164 = vmatprep.subr.mxu0 0.0
    %165 = vmatpush1.msra.mxu0 0.0
    %166 = vmatprep.subr.mxu0 0.0
    %167 = vmatpush1.msra.mxu0 0.0
    %168 = vmatprep.subr.mxu0 0.0
    %169 = vmatpush1.msra.mxu0 0.0
    %170 = vmatprep.subr.mxu0 0.0
    %171 = vmatpush1.msra.mxu0 0.0
    %172 = vmatprep.subr.mxu0 0.0
    %173 = vmatpush1.msra.mxu0 0.0
    %174 = vmatprep.subr.mxu0 0.0
    %175 = vmatpush1.msra.mxu0 0.0
    %176 = vmatprep.subr.mxu0 0.0
    %177 = vmatpush1.msra.mxu0 0.0
    %178 = vmatprep.subr.mxu0 0.0
    %179 = vmatpush1.msra.mxu0 0.0
    %180 = vmatprep.subr.mxu0 0.0
    %181 = vmatpush1.msra.mxu0 0.0
    %182 = vmatprep.subr.mxu0 0.0
    %183 = vmatpush1.msra.mxu0 0.0
    %184 = vmatprep.subr.mxu0 0.0
    %185 = vmatpush1.msra.mxu0 0.0
    %186 = vmatprep.subr.mxu0 0.0
    %187 = vmatpush1.msra.mxu0 0.0
    %188 = vmatprep.subr.mxu0 0.0
    %189 = vmatpush1.msra.mxu0 0.0
    %190 = vmatprep.subr.mxu0 0.0
    %191 = vmatpush1.msra.mxu0 0.0
    %192 = vmatprep.subr.mxu0 0.0
    %193 = vmatpush1.msra.mxu0 0.0
    %194 = vmatprep.subr.mxu0 0.0
    %195 = vmatpush1.msra.mxu0 0.0
    %196 = vmatprep.subr.mxu0 0.0
    %197 = vmatpush1.msra.mxu0 0.0
    %198 = vmatprep.subr.mxu0 0.0
    %199 = vmatpush1.msra.mxu0 0.0
    %200 = vmatprep.subr.mxu0 0.0
    %201 = vmatpush1.msra.mxu0 0.0
    %202 = vmatprep.subr.mxu0 0.0
    %203 = vmatpush1.msra.mxu0 0.0
    %204 = vmatprep.subr.mxu0 0.0
    %205 = vmatpush1.msra.mxu0 0.0
    %206 = vmatprep.subr.mxu0 0.0
    %207 = vmatpush1.msra.mxu0 0.0
    %208 = vmatprep.subr.mxu0 0.0
    %209 = vmatpush1.msra.mxu0 0.0
    %210 = vmatprep.mubr.f32.mxu0 0.0
    %211 = vmatmul.mubr.f32.gmra.mrb[0].mxu0 %v141
    %v212 = vpop.f32.mrb[0].mxu0
    %v213 = vadd.f32 0.0, %v212
    %v214 = vpop.f32.mrb[0].mxu0
    %215 = vmatprep.mubr.f32.mxu0 0.0
    %216 = vmatmul.mubr.f32.gmra.mrb[0].mxu0 %v144
    %v217 = vpop.f32.mrb[0].mxu0
    %v218 = vadd.f32 0.0, %v217
    %v219 = vpop.f32.mrb[0].mxu0
    %220 = vdwg.mxu0
    %vm221 = vcmask 130048
    %v222 = vsel %vm221, %v213, -inf
    %223 = vmax.xlane.f32.xlu0 %v222
    %v224 = vpop.xlane.xlu0 %223
    %v225 = vsel %vm221, %v218, -inf
    %226 = vmax.xlane.f32.xlu0 %v225
    %v227 = vpop.xlane.xlu0 %226
    %v228 = vsub.f32 %v213, %v224
    %v229 = vsub.f32 %v218, %v227
    %v230 = vmul.f32 %v228, 1.442695
    %v231 = vpow.pop %v230
    %v232 = vmul.f32 %v229, 1.442695
    %v233 = vpow.pop %v232
    %v234 = vsel %vm221, %v231, 0.0
    %235 = vadd.xlane.f32.xlu0 %v234
    %v236 = vpop.xlane.xlu0 %235
    %v237 = vsel %vm221, %v233, 0.0
    %238 = vadd.xlane.f32.xlu0 %v237
    %v239 = vpop.xlane.xlu0 %238
    %v240 = vld [vmem:[%s2] sm:$0xff]
    %v241 = vld [vmem:[%s2 + $0x8] sm:$0xff]
    %v243 = vsel %vm221, %v231, 0
    %v246 = vsel %vm221, %v233, 0
    %248 = vmatprep.subr.mxu0 0.0
    %249 = vmatpush1.msra.mxu0 %v240
    %250 = vmatprep.subr.mxu0 0.0
    %251 = vmatpush1.msra.mxu0 %v241
    %252 = vmatprep.subr.mxu0 0.0
    %253 = vmatpush1.msra.mxu0 0.0
    %254 = vmatprep.subr.mxu0 0.0
    %255 = vmatpush1.msra.mxu0 0.0
    %256 = vmatprep.subr.mxu0 0.0
    %257 = vmatpush1.msra.mxu0 0.0
    %258 = vmatprep.subr.mxu0 0.0
    %259 = vmatpush1.msra.mxu0 0.0
    %260 = vmatprep.subr.mxu0 0.0
    %261 = vmatpush1.msra.mxu0 0.0
    %262 = vmatprep.subr.mxu0 0.0
    %263 = vmatpush1.msra.mxu0 0.0
    %264 = vmatprep.subr.mxu0 0.0
    %265 = vmatpush1.msra.mxu0 0.0
    %266 = vmatprep.subr.mxu0 0.0
    %267 = vmatpush1.msra.mxu0 0.0
    %268 = vmatprep.subr.mxu0 0.0
    %269 = vmatpush1.msra.mxu0 0.0
    %270 = vmatprep.subr.mxu0 0.0
    %271 = vmatpush1.msra.mxu0 0.0
    %272 = vmatprep.subr.mxu0 0.0
    %273 = vmatpush1.msra.mxu0 0.0
    %274 = vmatprep.subr.mxu0 0.0
    %275 = vmatpush1.msra.mxu0 0.0
    %276 = vmatprep.subr.mxu0 0.0
    %277 = vmatpush1.msra.mxu0 0.0
    %278 = vmatprep.subr.mxu0 0.0
    %279 = vmatpush1.msra.mxu0 0.0
    %280 = vmatprep.subr.mxu0 0.0
    %281 = vmatpush1.msra.mxu0 0.0
    %282 = vmatprep.subr.mxu0 0.0
    %283 = vmatpush1.msra.mxu0 0.0
    %284 = vmatprep.subr.mxu0 0.0
    %285 = vmatpush1.msra.mxu0 0.0
    %286 = vmatprep.subr.mxu0 0.0
    %287 = vmatpush1.msra.mxu0 0.0
    %288 = vmatprep.subr.mxu0 0.0
    %289 = vmatpush1.msra.mxu0 0.0
    %290 = vmatprep.subr.mxu0 0.0
    %291 = vmatpush1.msra.mxu0 0.0
    %292 = vmatprep.subr.mxu0 0.0
    %293 = vmatpush1.msra.mxu0 0.0
    %294 = vmatprep.subr.mxu0 0.0
    %295 = vmatpush1.msra.mxu0 0.0
    %296 = vmatprep.subr.mxu0 0.0
    %297 = vmatpush1.msra.mxu0 0.0
    %298 = vmatprep.subr.mxu0 0.0
    %299 = vmatpush1.msra.mxu0 0.0
    %300 = vmatprep.subr.mxu0 0.0
    %301 = vmatpush1.msra.mxu0 0.0
    %302 = vmatprep.subr.mxu0 0.0
    %303 = vmatpush1.msra.mxu0 0.0
    %304 = vmatprep.subr.mxu0 0.0
    %305 = vmatpush1.msra.mxu0 0.0
    %306 = vmatprep.subr.mxu0 0.0
    %307 = vmatpush1.msra.mxu0 0.0
    %308 = vmatprep.subr.mxu0 0.0
    %309 = vmatpush1.msra.mxu0 0.0
    %310 = vmatprep.subr.mxu0 0.0
    %311 = vmatpush1.msra.mxu0 0.0
    %312 = vmatprep.mubr.f32.mxu0 0.0
    %313 = vmatmul.mubr.f32.gmra.mrb[0].mxu0 %v243
    %v314 = vpop.f32.mrb[0].mxu0
    %v315 = vadd.f32 0.0, %v314
    %v316 = vpop.f32.mrb[0].mxu0
    %317 = vmatprep.mubr.f32.mxu0 0.0
    %318 = vmatmul.mubr.f32.gmra.mrb[0].mxu0 %v246
    %v319 = vpop.f32.mrb[0].mxu0
    %v320 = vadd.f32 0.0, %v319
    %v321 = vpop.f32.mrb[0].mxu0
    %322 = vdwg.mxu0
    %v323 = vrcp.pop %v236
    %v324 = vmul.f32 1.0, %v323
    %v325 = vrcp.pop %v239
    %v326 = vmul.f32 1.0, %v325
    %v327 = vmul.f32 %v315, %v324
    %v328 = vmul.f32 %v320, %v326
    %329 = vst.msk [vmem:[#allocation2] sm:$0xff] %vm139, %v327
    %330 = vst.msk [vmem:[#allocation2 + $0x8] sm:$0xff] %vm139, %v328
    %s331 = scalar_lea.vmem %s1, 8
    %v332 = vld [vmem:[%s331] sm:$0xff]
    %333 = vrot.lane.b32.xlu0 %v136, 120
    %v334 = vpop.permute.xlu0 %333
    %335 = vrot.lane.b32.xlu0 %v137, 120
    %v336 = vpop.permute.xlu0 %335
    %v337 = vsel %vm139, %v334, 0
    %v339 = vsel %vm139, %v336, 0
    %341 = vmatprep.subr.mxu0 0.0
    %342 = vmatpush1.msra.mxu0 %v332
    %343 = vmatprep.subr.mxu0 0.0
    %344 = vmatpush1.msra.mxu0 0.0
    %345 = vmatprep.subr.mxu0 0.0
    %346 = vmatpush1.msra.mxu0 0.0
    %347 = vmatprep.subr.mxu0 0.0
    %348 = vmatpush1.msra.mxu0 0.0
    %349 = vmatprep.subr.mxu0 0.0
    %350 = vmatpush1.msra.mxu0 0.0
    %351 = vmatprep.subr.mxu0 0.0
    %352 = vmatpush1.msra.mxu0 0.0
    %353 = vmatprep.subr.mxu0 0.0
    %354 = vmatpush1.msra.mxu0 0.0
    %355 = vmatprep.subr.mxu0 0.0
    %356 = vmatpush1.msra.mxu0 0.0
    %357 = vmatprep.subr.mxu0 0.0
    %358 = vmatpush1.msra.mxu0 0.0
    %359 = vmatprep.subr.mxu0 0.0
    %360 = vmatpush1.msra.mxu0 0.0
    %361 = vmatprep.subr.mxu0 0.0
    %362 = vmatpush1.msra.mxu0 0.0
    %363 = vmatprep.subr.mxu0 0.0
    %364 = vmatpush1.msra.mxu0 0.0
    %365 = vmatprep.subr.mxu0 0.0
    %366 = vmatpush1.msra.mxu0 0.0
    %367 = vmatprep.subr.mxu0 0.0
    %368 = vmatpush1.msra.mxu0 0.0
    %369 = vmatprep.subr.mxu0 0.0
    %370 = vmatpush1.msra.mxu0 0.0
    %371 = vmatprep.subr.mxu0 0.0
    %372 = vmatpush1.msra.mxu0 0.0
    %373 = vmatprep.subr.mxu0 0.0
    %374 = vmatpush1.msra.mxu0 0.0
    %375 = vmatprep.subr.mxu0 0.0
    %376 = vmatpush1.msra.mxu0 0.0
    %377 = vmatprep.subr.mxu0 0.0
    %378 = vmatpush1.msra.mxu0 0.0
    %379 = vmatprep.subr.mxu0 0.0
    %380 = vmatpush1.msra.mxu0 0.0
    %381 = vmatprep.subr.mxu0 0.0
    %382 = vmatpush1.msra.mxu0 0.0
    %383 = vmatprep.subr.mxu0 0.0
    %384 = vmatpush1.msra.mxu0 0.0
    %385 = vmatprep.subr.mxu0 0.0
    %386 = vmatpush1.msra.mxu0 0.0
    %387 = vmatprep.subr.mxu0 0.0
    %388 = vmatpush1.msra.mxu0 0.0
    %389 = vmatprep.subr.mxu0 0.0
    %390 = vmatpush1.msra.mxu0 0.0
    %391 = vmatprep.subr.mxu0 0.0
    %392 = vmatpush1.msra.mxu0 0.0
    %393 = vmatprep.subr.mxu0 0.0
    %394 = vmatpush1.msra.mxu0 0.0
    %395 = vmatprep.subr.mxu0 0.0
    %396 = vmatpush1.msra.mxu0 0.0
    %397 = vmatprep.subr.mxu0 0.0
    %398 = vmatpush1.msra.mxu0 0.0
    %399 = vmatprep.subr.mxu0 0.0
    %400 = vmatpush1.msra.mxu0 0.0
    %401 = vmatprep.subr.mxu0 0.0
    %402 = vmatpush1.msra.mxu0 0.0
    %403 = vmatprep.subr.mxu0 0.0
    %404 = vmatpush1.msra.mxu0 0.0
    %405 = vmatprep.mubr.f32.mxu0 0.0
    %406 = vmatmul.mubr.f32.gmra.mrb[0].mxu0 %v337
    %v407 = vpop.f32.mrb[0].mxu0
    %v408 = vadd.f32 0.0, %v407
    %v409 = vpop.f32.mrb[0].mxu0
    %410 = vmatprep.mubr.f32.mxu0 0.0
    %411 = vmatmul.mubr.f32.gmra.mrb[0].mxu0 %v339
    %v412 = vpop.f32.mrb[0].mxu0
    %v413 = vadd.f32 0.0, %v412
    %v414 = vpop.f32.mrb[0].mxu0
    %415 = vdwg.mxu0
    %v416 = vsel %vm221, %v408, -inf
    %417 = vmax.xlane.f32.xlu0 %v416
    %v418 = vpop.xlane.xlu0 %417
    %v419 = vsel %vm221, %v413, -inf
    %420 = vmax.xlane.f32.xlu0 %v419
    %v421 = vpop.xlane.xlu0 %420
    %v422 = vsub.f32 %v408, %v418
    %v423 = vsub.f32 %v413, %v421
    %v424 = vmul.f32 %v422, 1.442695
    %v425 = vpow.pop %v424
    %v426 = vmul.f32 %v423, 1.442695
    %v427 = vpow.pop %v426
    %v428 = vsel %vm221, %v425, 0.0
    %429 = vadd.xlane.f32.xlu0 %v428
    %v430 = vpop.xlane.xlu0 %429
    %v431 = vsel %vm221, %v427, 0.0
    %432 = vadd.xlane.f32.xlu0 %v431
    %v433 = vpop.xlane.xlu0 %432
    %s434 = scalar_lea.vmem %s2, 16
    %v435 = vld [vmem:[%s434] sm:$0xff]
    %v436 = vld [vmem:[%s434 + $0x8] sm:$0xff]
    %v438 = vsel %vm221, %v425, 0
    %v441 = vsel %vm221, %v427, 0
    %443 = vmatprep.subr.mxu0 0.0
    %444 = vmatpush1.msra.mxu0 %v435
    %445 = vmatprep.subr.mxu0 0.0
    %446 = vmatpush1.msra.mxu0 %v436
    %447 = vmatprep.subr.mxu0 0.0
    %448 = vmatpush1.msra.mxu0 0.0
    %449 = vmatprep.subr.mxu0 0.0
    %450 = vmatpush1.msra.mxu0 0.0
    %451 = vmatprep.subr.mxu0 0.0
    %452 = vmatpush1.msra.mxu0 0.0
    %453 = vmatprep.subr.mxu0 0.0
    %454 = vmatpush1.msra.mxu0 0.0
    %455 = vmatprep.subr.mxu0 0.0
    %456 = vmatpush1.msra.mxu0 0.0
    %457 = vmatprep.subr.mxu0 0.0
    %458 = vmatpush1.msra.mxu0 0.0
    %459 = vmatprep.subr.mxu0 0.0
    %460 = vmatpush1.msra.mxu0 0.0
    %461 = vmatprep.subr.mxu0 0.0
    %462 = vmatpush1.msra.mxu0 0.0
    %463 = vmatprep.subr.mxu0 0.0
    %464 = vmatpush1.msra.mxu0 0.0
    %465 = vmatprep.subr.mxu0 0.0
    %466 = vmatpush1.msra.mxu0 0.0
    %467 = vmatprep.subr.mxu0 0.0
    %468 = vmatpush1.msra.mxu0 0.0
    %469 = vmatprep.subr.mxu0 0.0
    %470 = vmatpush1.msra.mxu0 0.0
    %471 = vmatprep.subr.mxu0 0.0
    %472 = vmatpush1.msra.mxu0 0.0
    %473 = vmatprep.subr.mxu0 0.0
    %474 = vmatpush1.msra.mxu0 0.0
    %475 = vmatprep.subr.mxu0 0.0
    %476 = vmatpush1.msra.mxu0 0.0
    %477 = vmatprep.subr.mxu0 0.0
    %478 = vmatpush1.msra.mxu0 0.0
    %479 = vmatprep.subr.mxu0 0.0
    %480 = vmatpush1.msra.mxu0 0.0
    %481 = vmatprep.subr.mxu0 0.0
    %482 = vmatpush1.msra.mxu0 0.0
    %483 = vmatprep.subr.mxu0 0.0
    %484 = vmatpush1.msra.mxu0 0.0
    %485 = vmatprep.subr.mxu0 0.0
    %486 = vmatpush1.msra.mxu0 0.0
    %487 = vmatprep.subr.mxu0 0.0
    %488 = vmatpush1.msra.mxu0 0.0
    %489 = vmatprep.subr.mxu0 0.0
    %490 = vmatpush1.msra.mxu0 0.0
    %491 = vmatprep.subr.mxu0 0.0
    %492 = vmatpush1.msra.mxu0 0.0
    %493 = vmatprep.subr.mxu0 0.0
    %494 = vmatpush1.msra.mxu0 0.0
    %495 = vmatprep.subr.mxu0 0.0
    %496 = vmatpush1.msra.mxu0 0.0
    %497 = vmatprep.subr.mxu0 0.0
    %498 = vmatpush1.msra.mxu0 0.0
    %499 = vmatprep.subr.mxu0 0.0
    %500 = vmatpush1.msra.mxu0 0.0
    %501 = vmatprep.subr.mxu0 0.0
    %502 = vmatpush1.msra.mxu0 0.0
    %503 = vmatprep.subr.mxu0 0.0
    %504 = vmatpush1.msra.mxu0 0.0
    %505 = vmatprep.subr.mxu0 0.0
    %506 = vmatpush1.msra.mxu0 0.0
    %507 = vmatprep.mubr.f32.mxu0 0.0
    %508 = vmatmul.mubr.f32.gmra.mrb[0].mxu0 %v438
    %v509 = vpop.f32.mrb[0].mxu0
    %v510 = vadd.f32 0.0, %v509
    %v511 = vpop.f32.mrb[0].mxu0
    %512 = vmatprep.mubr.f32.mxu0 0.0
    %513 = vmatmul.mubr.f32.gmra.mrb[0].mxu0 %v441
    %v514 = vpop.f32.mrb[0].mxu0
    %v515 = vadd.f32 0.0, %v514
    %v516 = vpop.f32.mrb[0].mxu0
    %517 = vdwg.mxu0
    %v518 = vrcp.pop %v430
    %v519 = vmul.f32 1.0, %v518
    %v520 = vrcp.pop %v433
    %v521 = vmul.f32 1.0, %v520
    %v522 = vmul.f32 %v510, %v519
    %v523 = vmul.f32 %v515, %v521
    %526 = vrot.lane.b32.xlu0 %v522, 8
    %v527 = vpop.permute.xlu0 %526
    %528 = vrot.lane.b32.xlu0 %v523, 8
    %v529 = vpop.permute.xlu0 %528
    %vm532 = vcmask 130112
    %533 = vst.msk [vmem:[#allocation2] sm:$0xff] %vm532, %v527
    %534 = vst.msk [vmem:[#allocation2 + $0x8] sm:$0xff] %vm532, %v529
    %s535 = scalar_lea.vmem %s1, 16
    %v536 = vld [vmem:[%s535] sm:$0xff]
    %537 = vrot.lane.b32.xlu0 %v136, 112
    %v538 = vpop.permute.xlu0 %537
    %539 = vrot.lane.b32.xlu0 %v137, 112
    %v540 = vpop.permute.xlu0 %539
    %v541 = vsel %vm139, %v538, 0
    %v543 = vsel %vm139, %v540, 0
    %545 = vmatprep.subr.mxu0 0.0
    %546 = vmatpush1.msra.mxu0 %v536
    %547 = vmatprep.subr.mxu0 0.0
    %548 = vmatpush1.msra.mxu0 0.0
    %549 = vmatprep.subr.mxu0 0.0
    %550 = vmatpush1.msra.mxu0 0.0
    %551 = vmatprep.subr.mxu0 0.0
    %552 = vmatpush1.msra.mxu0 0.0
    %553 = vmatprep.subr.mxu0 0.0
    %554 = vmatpush1.msra.mxu0 0.0
    %555 = vmatprep.subr.mxu0 0.0
    %556 = vmatpush1.msra.mxu0 0.0
    %557 = vmatprep.subr.mxu0 0.0
    %558 = vmatpush1.msra.mxu0 0.0
    %559 = vmatprep.subr.mxu0 0.0
    %560 = vmatpush1.msra.mxu0 0.0
    %561 = vmatprep.subr.mxu0 0.0
    %562 = vmatpush1.msra.mxu0 0.0
    %563 = vmatprep.subr.mxu0 0.0
    %564 = vmatpush1.msra.mxu0 0.0
    %565 = vmatprep.subr.mxu0 0.0
    %566 = vmatpush1.msra.mxu0 0.0
    %567 = vmatprep.subr.mxu0 0.0
    %568 = vmatpush1.msra.mxu0 0.0
    %569 = vmatprep.subr.mxu0 0.0
    %570 = vmatpush1.msra.mxu0 0.0
    %571 = vmatprep.subr.mxu0 0.0
    %572 = vmatpush1.msra.mxu0 0.0
    %573 = vmatprep.subr.mxu0 0.0
    %574 = vmatpush1.msra.mxu0 0.0
    %575 = vmatprep.subr.mxu0 0.0
    %576 = vmatpush1.msra.mxu0 0.0
    %577 = vmatprep.subr.mxu0 0.0
    %578 = vmatpush1.msra.mxu0 0.0
    %579 = vmatprep.subr.mxu0 0.0
    %580 = vmatpush1.msra.mxu0 0.0
    %581 = vmatprep.subr.mxu0 0.0
    %582 = vmatpush1.msra.mxu0 0.0
    %583 = vmatprep.subr.mxu0 0.0
    %584 = vmatpush1.msra.mxu0 0.0
    %585 = vmatprep.subr.mxu0 0.0
    %586 = vmatpush1.msra.mxu0 0.0
    %587 = vmatprep.subr.mxu0 0.0
    %588 = vmatpush1.msra.mxu0 0.0
    %589 = vmatprep.subr.mxu0 0.0
    %590 = vmatpush1.msra.mxu0 0.0
    %591 = vmatprep.subr.mxu0 0.0
    %592 = vmatpush1.msra.mxu0 0.0
    %593 = vmatprep.subr.mxu0 0.0
    %594 = vmatpush1.msra.mxu0 0.0
    %595 = vmatprep.subr.mxu0 0.0
    %596 = vmatpush1.msra.mxu0 0.0
    %597 = vmatprep.subr.mxu0 0.0
    %598 = vmatpush1.msra.mxu0 0.0
    %599 = vmatprep.subr.mxu0 0.0
    %600 = vmatpush1.msra.mxu0 0.0
    %601 = vmatprep.subr.mxu0 0.0
    %602 = vmatpush1.msra.mxu0 0.0
    %603 = vmatprep.subr.mxu0 0.0
    %604 = vmatpush1.msra.mxu0 0.0
    %605 = vmatprep.subr.mxu0 0.0
    %606 = vmatpush1.msra.mxu0 0.0
    %607 = vmatprep.subr.mxu0 0.0
    %608 = vmatpush1.msra.mxu0 0.0
    %609 = vmatprep.mubr.f32.mxu0 0.0
    %610 = vmatmul.mubr.f32.gmra.mrb[0].mxu0 %v541
    %v611 = vpop.f32.mrb[0].mxu0
    %v612 = vadd.f32 0.0, %v611
    %v613 = vpop.f32.mrb[0].mxu0
    %614 = vmatprep.mubr.f32.mxu0 0.0
    %615 = vmatmul.mubr.f32.gmra.mrb[0].mxu0 %v543
    %v616 = vpop.f32.mrb[0].mxu0
    %v617 = vadd.f32 0.0, %v616
    %v618 = vpop.f32.mrb[0].mxu0
    %619 = vdwg.mxu0
    %v620 = vsel %vm221, %v612, -inf
    %621 = vmax.xlane.f32.xlu0 %v620
    %v622 = vpop.xlane.xlu0 %621
    %v623 = vsel %vm221, %v617, -inf
    %624 = vmax.xlane.f32.xlu0 %v623
    %v625 = vpop.xlane.xlu0 %624
    %v626 = vsub.f32 %v612, %v622
    %v627 = vsub.f32 %v617, %v625
    %v628 = vmul.f32 %v626, 1.442695
    %v629 = vpow.pop %v628
    %v630 = vmul.f32 %v627, 1.442695
    %v631 = vpow.pop %v630
    %v632 = vsel %vm221, %v629, 0.0
    %633 = vadd.xlane.f32.xlu0 %v632
    %v634 = vpop.xlane.xlu0 %633
    %v635 = vsel %vm221, %v631, 0.0
    %636 = vadd.xlane.f32.xlu0 %v635
    %v637 = vpop.xlane.xlu0 %636
    %s638 = scalar_lea.vmem %s2, 32
    %v639 = vld [vmem:[%s638] sm:$0xff]
    %v640 = vld [vmem:[%s638 + $0x8] sm:$0xff]
    %v642 = vsel %vm221, %v629, 0
    %v645 = vsel %vm221, %v631, 0
    %647 = vmatprep.subr.mxu0 0.0
    %648 = vmatpush1.msra.mxu0 %v639
    %649 = vmatprep.subr.mxu0 0.0
    %650 = vmatpush1.msra.mxu0 %v640
    %651 = vmatprep.subr.mxu0 0.0
    %652 = vmatpush1.msra.mxu0 0.0
    %653 = vmatprep.subr.mxu0 0.0
    %654 = vmatpush1.msra.mxu0 0.0
    %655 = vmatprep.subr.mxu0 0.0
    %656 = vmatpush1.msra.mxu0 0.0
    %657 = vmatprep.subr.mxu0 0.0
    %658 = vmatpush1.msra.mxu0 0.0
    %659 = vmatprep.subr.mxu0 0.0
    %660 = vmatpush1.msra.mxu0 0.0
    %661 = vmatprep.subr.mxu0 0.0
    %662 = vmatpush1.msra.mxu0 0.0
    %663 = vmatprep.subr.mxu0 0.0
    %664 = vmatpush1.msra.mxu0 0.0
    %665 = vmatprep.subr.mxu0 0.0
    %666 = vmatpush1.msra.mxu0 0.0
    %667 = vmatprep.subr.mxu0 0.0
    %668 = vmatpush1.msra.mxu0 0.0
    %669 = vmatprep.subr.mxu0 0.0
    %670 = vmatpush1.msra.mxu0 0.0
    %671 = vmatprep.subr.mxu0 0.0
    %672 = vmatpush1.msra.mxu0 0.0
    %673 = vmatprep.subr.mxu0 0.0
    %674 = vmatpush1.msra.mxu0 0.0
    %675 = vmatprep.subr.mxu0 0.0
    %676 = vmatpush1.msra.mxu0 0.0
    %677 = vmatprep.subr.mxu0 0.0
    %678 = vmatpush1.msra.mxu0 0.0
    %679 = vmatprep.subr.mxu0 0.0
    %680 = vmatpush1.msra.mxu0 0.0
    %681 = vmatprep.subr.mxu0 0.0
    %682 = vmatpush1.msra.mxu0 0.0
    %683 = vmatprep.subr.mxu0 0.0
    %684 = vmatpush1.msra.mxu0 0.0
    %685 = vmatprep.subr.mxu0 0.0
    %686 = vmatpush1.msra.mxu0 0.0
    %687 = vmatprep.subr.mxu0 0.0
    %688 = vmatpush1.msra.mxu0 0.0
    %689 = vmatprep.subr.mxu0 0.0
    %690 = vmatpush1.msra.mxu0 0.0
    %691 = vmatprep.subr.mxu0 0.0
    %692 = vmatpush1.msra.mxu0 0.0
    %693 = vmatprep.subr.mxu0 0.0
    %694 = vmatpush1.msra.mxu0 0.0
    %695 = vmatprep.subr.mxu0 0.0
    %696 = vmatpush1.msra.mxu0 0.0
    %697 = vmatprep.subr.mxu0 0.0
    %698 = vmatpush1.msra.mxu0 0.0
    %699 = vmatprep.subr.mxu0 0.0
    %700 = vmatpush1.msra.mxu0 0.0
    %701 = vmatprep.subr.mxu0 0.0
    %702 = vmatpush1.msra.mxu0 0.0
    %703 = vmatprep.subr.mxu0 0.0
    %704 = vmatpush1.msra.mxu0 0.0
    %705 = vmatprep.subr.mxu0 0.0
    %706 = vmatpush1.msra.mxu0 0.0
    %707 = vmatprep.subr.mxu0 0.0
    %708 = vmatpush1.msra.mxu0 0.0
    %709 = vmatprep.subr.mxu0 0.0
    %710 = vmatpush1.msra.mxu0 0.0
    %711 = vmatprep.mubr.f32.mxu0 0.0
    %712 = vmatmul.mubr.f32.gmra.mrb[0].mxu0 %v642
    %v713 = vpop.f32.mrb[0].mxu0
    %v714 = vadd.f32 0.0, %v713
    %v715 = vpop.f32.mrb[0].mxu0
    %716 = vmatprep.mubr.f32.mxu0 0.0
    %717 = vmatmul.mubr.f32.gmra.mrb[0].mxu0 %v645
    %v718 = vpop.f32.mrb[0].mxu0
    %v719 = vadd.f32 0.0, %v718
    %v720 = vpop.f32.mrb[0].mxu0
    %721 = vdwg.mxu0
    %v722 = vrcp.pop %v634
    %v723 = vmul.f32 1.0, %v722
    %v724 = vrcp.pop %v637
    %v725 = vmul.f32 1.0, %v724
    %v726 = vmul.f32 %v714, %v723
    %v727 = vmul.f32 %v719, %v725
    %730 = vrot.lane.b32.xlu0 %v726, 16
    %v731 = vpop.permute.xlu0 %730
    %732 = vrot.lane.b32.xlu0 %v727, 16
    %v733 = vpop.permute.xlu0 %732
    %vm736 = vcmask 195712
    %737 = vst.msk [vmem:[#allocation2] sm:$0xff] %vm736, %v731
    %738 = vst.msk [vmem:[#allocation2 + $0x8] sm:$0xff] %vm736, %v733
    %s739 = scalar_lea.vmem %s1, 24
    %v740 = vld [vmem:[%s739] sm:$0xff]
    %741 = vrot.lane.b32.xlu0 %v136, 104
    %v742 = vpop.permute.xlu0 %741
    %743 = vrot.lane.b32.xlu0 %v137, 104
    %v744 = vpop.permute.xlu0 %743
    %v745 = vsel %vm139, %v742, 0
    %v747 = vsel %vm139, %v744, 0
    %749 = vmatprep.subr.mxu0 0.0
    %750 = vmatpush1.msra.mxu0 %v740
    %751 = vmatprep.subr.mxu0 0.0
    %752 = vmatpush1.msra.mxu0 0.0
    %753 = vmatprep.subr.mxu0 0.0
    %754 = vmatpush1.msra.mxu0 0.0
    %755 = vmatprep.subr.mxu0 0.0
    %756 = vmatpush1.msra.mxu0 0.0
    %757 = vmatprep.subr.mxu0 0.0
    %758 = vmatpush1.msra.mxu0 0.0
    %759 = vmatprep.subr.mxu0 0.0
    %760 = vmatpush1.msra.mxu0 0.0
    %761 = vmatprep.subr.mxu0 0.0
    %762 = vmatpush1.msra.mxu0 0.0
    %763 = vmatprep.subr.mxu0 0.0
    %764 = vmatpush1.msra.mxu0 0.0
    %765 = vmatprep.subr.mxu0 0.0
    %766 = vmatpush1.msra.mxu0 0.0
    %767 = vmatprep.subr.mxu0 0.0
    %768 = vmatpush1.msra.mxu0 0.0
    %769 = vmatprep.subr.mxu0 0.0
    %770 = vmatpush1.msra.mxu0 0.0
    %771 = vmatprep.subr.mxu0 0.0
    %772 = vmatpush1.msra.mxu0 0.0
    %773 = vmatprep.subr.mxu0 0.0
    %774 = vmatpush1.msra.mxu0 0.0
    %775 = vmatprep.subr.mxu0 0.0
    %776 = vmatpush1.msra.mxu0 0.0
    %777 = vmatprep.subr.mxu0 0.0
    %778 = vmatpush1.msra.mxu0 0.0
    %779 = vmatprep.subr.mxu0 0.0
    %780 = vmatpush1.msra.mxu0 0.0
    %781 = vmatprep.subr.mxu0 0.0
    %782 = vmatpush1.msra.mxu0 0.0
    %783 = vmatprep.subr.mxu0 0.0
    %784 = vmatpush1.msra.mxu0 0.0
    %785 = vmatprep.subr.mxu0 0.0
    %786 = vmatpush1.msra.mxu0 0.0
    %787 = vmatprep.subr.mxu0 0.0
    %788 = vmatpush1.msra.mxu0 0.0
    %789 = vmatprep.subr.mxu0 0.0
    %790 = vmatpush1.msra.mxu0 0.0
    %791 = vmatprep.subr.mxu0 0.0
    %792 = vmatpush1.msra.mxu0 0.0
    %793 = vmatprep.subr.mxu0 0.0
    %794 = vmatpush1.msra.mxu0 0.0
    %795 = vmatprep.subr.mxu0 0.0
    %796 = vmatpush1.msra.mxu0 0.0
    %797 = vmatprep.subr.mxu0 0.0
    %798 = vmatpush1.msra.mxu0 0.0
    %799 = vmatprep.subr.mxu0 0.0
    %800 = vmatpush1.msra.mxu0 0.0
    %801 = vmatprep.subr.mxu0 0.0
    %802 = vmatpush1.msra.mxu0 0.0
    %803 = vmatprep.subr.mxu0 0.0
    %804 = vmatpush1.msra.mxu0 0.0
    %805 = vmatprep.subr.mxu0 0.0
    %806 = vmatpush1.msra.mxu0 0.0
    %807 = vmatprep.subr.mxu0 0.0
    %808 = vmatpush1.msra.mxu0 0.0
    %809 = vmatprep.subr.mxu0 0.0
    %810 = vmatpush1.msra.mxu0 0.0
    %811 = vmatprep.subr.mxu0 0.0
    %812 = vmatpush1.msra.mxu0 0.0
    %813 = vmatprep.mubr.f32.mxu0 0.0
    %814 = vmatmul.mubr.f32.gmra.mrb[0].mxu0 %v745
    %v815 = vpop.f32.mrb[0].mxu0
    %v816 = vadd.f32 0.0, %v815
    %v817 = vpop.f32.mrb[0].mxu0
    %818 = vmatprep.mubr.f32.mxu0 0.0
    %819 = vmatmul.mubr.f32.gmra.mrb[0].mxu0 %v747
    %v820 = vpop.f32.mrb[0].mxu0
    %v821 = vadd.f32 0.0, %v820
    %v822 = vpop.f32.mrb[0].mxu0
    %823 = vdwg.mxu0
    %v824 = vsel %vm221, %v816, -inf
    %825 = vmax.xlane.f32.xlu0 %v824
    %v826 = vpop.xlane.xlu0 %825
    %v827 = vsel %vm221, %v821, -inf
    %828 = vmax.xlane.f32.xlu0 %v827
    %v829 = vpop.xlane.xlu0 %828
    %v830 = vsub.f32 %v816, %v826
    %v831 = vsub.f32 %v821, %v829
    %v832 = vmul.f32 %v830, 1.442695
    %v833 = vpow.pop %v832
    %v834 = vmul.f32 %v831, 1.442695
    %v835 = vpow.pop %v834
    %v836 = vsel %vm221, %v833, 0.0
    %837 = vadd.xlane.f32.xlu0 %v836
    %v838 = vpop.xlane.xlu0 %837
    %v839 = vsel %vm221, %v835, 0.0
    %840 = vadd.xlane.f32.xlu0 %v839
    %v841 = vpop.xlane.xlu0 %840
    %s842 = scalar_lea.vmem %s2, 48
    %v843 = vld [vmem:[%s842] sm:$0xff]
    %v844 = vld [vmem:[%s842 + $0x8] sm:$0xff]
    %v846 = vsel %vm221, %v833, 0
    %v849 = vsel %vm221, %v835, 0
    %851 = vmatprep.subr.mxu0 0.0
    %852 = vmatpush1.msra.mxu0 %v843
    %853 = vmatprep.subr.mxu0 0.0
    %854 = vmatpush1.msra.mxu0 %v844
    %855 = vmatprep.subr.mxu0 0.0
    %856 = vmatpush1.msra.mxu0 0.0
    %857 = vmatprep.subr.mxu0 0.0
    %858 = vmatpush1.msra.mxu0 0.0
    %859 = vmatprep.subr.mxu0 0.0
    %860 = vmatpush1.msra.mxu0 0.0
    %861 = vmatprep.subr.mxu0 0.0
    %862 = vmatpush1.msra.mxu0 0.0
    %863 = vmatprep.subr.mxu0 0.0
    %864 = vmatpush1.msra.mxu0 0.0
    %865 = vmatprep.subr.mxu0 0.0
    %866 = vmatpush1.msra.mxu0 0.0
    %867 = vmatprep.subr.mxu0 0.0
    %868 = vmatpush1.msra.mxu0 0.0
    %869 = vmatprep.subr.mxu0 0.0
    %870 = vmatpush1.msra.mxu0 0.0
    %871 = vmatprep.subr.mxu0 0.0
    %872 = vmatpush1.msra.mxu0 0.0
    %873 = vmatprep.subr.mxu0 0.0
    %874 = vmatpush1.msra.mxu0 0.0
    %875 = vmatprep.subr.mxu0 0.0
    %876 = vmatpush1.msra.mxu0 0.0
    %877 = vmatprep.subr.mxu0 0.0
    %878 = vmatpush1.msra.mxu0 0.0
    %879 = vmatprep.subr.mxu0 0.0
    %880 = vmatpush1.msra.mxu0 0.0
    %881 = vmatprep.subr.mxu0 0.0
    %882 = vmatpush1.msra.mxu0 0.0
    %883 = vmatprep.subr.mxu0 0.0
    %884 = vmatpush1.msra.mxu0 0.0
    %885 = vmatprep.subr.mxu0 0.0
    %886 = vmatpush1.msra.mxu0 0.0
    %887 = vmatprep.subr.mxu0 0.0
    %888 = vmatpush1.msra.mxu0 0.0
    %889 = vmatprep.subr.mxu0 0.0
    %890 = vmatpush1.msra.mxu0 0.0
    %891 = vmatprep.subr.mxu0 0.0
    %892 = vmatpush1.msra.mxu0 0.0
    %893 = vmatprep.subr.mxu0 0.0
    %894 = vmatpush1.msra.mxu0 0.0
    %895 = vmatprep.subr.mxu0 0.0
    %896 = vmatpush1.msra.mxu0 0.0
    %897 = vmatprep.subr.mxu0 0.0
    %898 = vmatpush1.msra.mxu0 0.0
    %899 = vmatprep.subr.mxu0 0.0
    %900 = vmatpush1.msra.mxu0 0.0
    %901 = vmatprep.subr.mxu0 0.0
    %902 = vmatpush1.msra.mxu0 0.0
    %903 = vmatprep.subr.mxu0 0.0
    %904 = vmatpush1.msra.mxu0 0.0
    %905 = vmatprep.subr.mxu0 0.0
    %906 = vmatpush1.msra.mxu0 0.0
    %907 = vmatprep.subr.mxu0 0.0
    %908 = vmatpush1.msra.mxu0 0.0
    %909 = vmatprep.subr.mxu0 0.0
    %910 = vmatpush1.msra.mxu0 0.0
    %911 = vmatprep.subr.mxu0 0.0
    %912 = vmatpush1.msra.mxu0 0.0
    %913 = vmatprep.subr.mxu0 0.0
    %914 = vmatpush1.msra.mxu0 0.0
    %915 = vmatprep.mubr.f32.mxu0 0.0
    %916 = vmatmul.mubr.f32.gmra.mrb[0].mxu0 %v846
    %v917 = vpop.f32.mrb[0].mxu0
    %v918 = vadd.f32 0.0, %v917
    %v919 = vpop.f32.mrb[0].mxu0
    %920 = vmatprep.mubr.f32.mxu0 0.0
    %921 = vmatmul.mubr.f32.gmra.mrb[0].mxu0 %v849
    %v922 = vpop.f32.mrb[0].mxu0
    %v923 = vadd.f32 0.0, %v922
    %v924 = vpop.f32.mrb[0].mxu0
    %925 = vdwg.mxu0
    %v926 = vrcp.pop %v838
    %v927 = vmul.f32 1.0, %v926
    %v928 = vrcp.pop %v841
    %v929 = vmul.f32 1.0, %v928
    %v930 = vmul.f32 %v918, %v927
    %v931 = vmul.f32 %v923, %v929
    %934 = vrot.lane.b32.xlu0 %v930, 24
    %v935 = vpop.permute.xlu0 %934
    %936 = vrot.lane.b32.xlu0 %v931, 24
    %v937 = vpop.permute.xlu0 %936
    %vm940 = vcmask 261312
    %941 = vst.msk [vmem:[#allocation2] sm:$0xff] %vm940, %v935
    %942 = vst.msk [vmem:[#allocation2 + $0x8] sm:$0xff] %vm940, %v937
    %v943 = vld [vmem:[#allocation2] sm:$0xff]
    %v944 = vld [vmem:[#allocation2 + $0x8] sm:$0xff]
    %v945 = vld [vmem:[%s5] sm:$0xff]
    %v946 = vld [vmem:[%s5 + $0x8] sm:$0xff]
    %v947 = vld [vmem:[%s5 + $0x10] sm:$0xff]
    %v948 = vld [vmem:[%s5 + $0x18] sm:$0xff]
    %v949 = vld [vmem:[%s6] sm:$0x1]
    %v951 = vlaneseq
    %v952 = vshrl.u32 %v951, 7
    %v953 = vsub.s32 0, %v952
    %v954 = vrot.slane %v949, %v953
    %v957 = vsel %vm54, %v943, 0
    %v960 = vsel %vm54, %v944, 0
    %962 = vmatprep.subr.mxu0 0.0
    %963 = vmatpush1.msra.mxu0 %v945
    %964 = vmatprep.subr.mxu0 0.0
    %965 = vmatpush1.msra.mxu0 %v946
    %966 = vmatprep.subr.mxu0 0.0
    %967 = vmatpush1.msra.mxu0 %v947
    %968 = vmatprep.subr.mxu0 0.0
    %969 = vmatpush1.msra.mxu0 %v948
    %970 = vmatprep.subr.mxu0 0.0
    %971 = vmatpush1.msra.mxu0 0.0
    %972 = vmatprep.subr.mxu0 0.0
    %973 = vmatpush1.msra.mxu0 0.0
    %974 = vmatprep.subr.mxu0 0.0
    %975 = vmatpush1.msra.mxu0 0.0
    %976 = vmatprep.subr.mxu0 0.0
    %977 = vmatpush1.msra.mxu0 0.0
    %978 = vmatprep.subr.mxu0 0.0
    %979 = vmatpush1.msra.mxu0 0.0
    %980 = vmatprep.subr.mxu0 0.0
    %981 = vmatpush1.msra.mxu0 0.0
    %982 = vmatprep.subr.mxu0 0.0
    %983 = vmatpush1.msra.mxu0 0.0
    %984 = vmatprep.subr.mxu0 0.0
    %985 = vmatpush1.msra.mxu0 0.0
    %986 = vmatprep.subr.mxu0 0.0
    %987 = vmatpush1.msra.mxu0 0.0
    %988 = vmatprep.subr.mxu0 0.0
    %989 = vmatpush1.msra.mxu0 0.0
    %990 = vmatprep.subr.mxu0 0.0
    %991 = vmatpush1.msra.mxu0 0.0
    %992 = vmatprep.subr.mxu0 0.0
    %993 = vmatpush1.msra.mxu0 0.0
    %994 = vmatprep.subr.mxu0 0.0
    %995 = vmatpush1.msra.mxu0 0.0
    %996 = vmatprep.subr.mxu0 0.0
    %997 = vmatpush1.msra.mxu0 0.0
    %998 = vmatprep.subr.mxu0 0.0
    %999 = vmatpush1.msra.mxu0 0.0
    %1000 = vmatprep.subr.mxu0 0.0
    %1001 = vmatpush1.msra.mxu0 0.0
    %1002 = vmatprep.subr.mxu0 0.0
    %1003 = vmatpush1.msra.mxu0 0.0
    %1004 = vmatprep.subr.mxu0 0.0
    %1005 = vmatpush1.msra.mxu0 0.0
    %1006 = vmatprep.subr.mxu0 0.0
    %1007 = vmatpush1.msra.mxu0 0.0
    %1008 = vmatprep.subr.mxu0 0.0
    %1009 = vmatpush1.msra.mxu0 0.0
    %1010 = vmatprep.subr.mxu0 0.0
    %1011 = vmatpush1.msra.mxu0 0.0
    %1012 = vmatprep.subr.mxu0 0.0
    %1013 = vmatpush1.msra.mxu0 0.0
    %1014 = vmatprep.subr.mxu0 0.0
    %1015 = vmatpush1.msra.mxu0 0.0
    %1016 = vmatprep.subr.mxu0 0.0
    %1017 = vmatpush1.msra.mxu0 0.0
    %1018 = vmatprep.subr.mxu0 0.0
    %1019 = vmatpush1.msra.mxu0 0.0
    %1020 = vmatprep.subr.mxu0 0.0
    %1021 = vmatpush1.msra.mxu0 0.0
    %1022 = vmatprep.subr.mxu0 0.0
    %1023 = vmatpush1.msra.mxu0 0.0
    %1024 = vmatprep.subr.mxu0 0.0
    %1025 = vmatpush1.msra.mxu0 0.0
    %1026 = vmatprep.mubr.f32.mxu0 0.0
    %1027 = vmatmul.mubr.f32.gmra.mrb[0].mxu0 %v957
    %v1028 = vpop.f32.mrb[0].mxu0
    %v1029 = vadd.f32 %v954, %v1028
    %v1030 = vpop.f32.mrb[0].mxu0
    %1031 = vmatprep.mubr.f32.mxu0 0.0
    %1032 = vmatmul.mubr.f32.gmra.mrb[0].mxu0 %v960
    %v1033 = vpop.f32.mrb[0].mxu0
    %v1034 = vadd.f32 %v954, %v1033
    %v1035 = vpop.f32.mrb[0].mxu0
    %1036 = vdwg.mxu0
    %vm1037 = vcmask 523264
    %1038 = vst.msk [vmem:[#allocation6] sm:$0xff] %vm1037, %v1029
    %1039 = vst.msk [vmem:[#allocation6 + $0x8] sm:$0xff] %vm1037, %v1034
    // Predicated region
    $region34: #{tpu_custom_call.1} parent=1 // pred_check
      _
    $region35: #{tpu_custom_call.1} parent=1 // pred_check_branch
      %1041 = sbr.rel (0) target = $region37
    $region36: #{tpu_custom_call.1} parent=1 // pred_region
      %s1043 = ssub.s32 256, 256
      %1044 = vsyncadd [#allocation5], %s1043
      %s1045 = sshll.u32 [#allocation6], 4
      %s1046 = int_to_ptr.vmem [resolvable:$true] %s1045
      %1051 = dma.vmem_to_hbm [thread:$0]  %s1046, 256, %s7, [#allocation5], 128, 128, 8
    $region37: #{tpu_custom_call.1} parent=1 // pred_fallthru
      _
    // Predicated region
    $region38: #{tpu_custom_call.1} parent=1 // pred_check
      _
    $region39: #{tpu_custom_call.1} parent=1 // pred_check_branch
      %1053 = sbr.rel (0) target = $region41
    $region40: #{tpu_custom_call.1} parent=1 // pred_region
      %1054 = dma.done [#allocation5], 256
    $region41: #{tpu_custom_call.1} parent=1 // pred_fallthru
      _
    %1055 = vsyncpa [#allocation4], 1
    %1056 = vsyncpa [#allocation5], 1

</llo_original>
